<compile_context>
chip_gen: v6e
topology: v6e:2x2x1
jax: 0.10.0
libtpu: 0.0.40
codegen_flags: <defaults>
</compile_context>

<pallas_src>
import jax
import jax.numpy as jnp
from jax.experimental import pallas as pl
from jax.experimental.pallas import tpu as pltpu


# Per-buffer tile byte budget. x-in + out, each double-buffered -> ~4 large
# buffers (+ tiny scale column), so 4 MiB tiles stay well under the 32 MiB
# scoped-VMEM limit requested below on every generation (v5e default is
# 16 MiB, raised explicitly; physical VMEM is >= 64 MiB on all of them).
_MAX_TILE_BYTES = 4 * 1024 * 1024
_VMEM_LIMIT_BYTES = 32 * 1024 * 1024


def _round_down(x, m):
    return (x // m) * m


def _drop_path_rows_kernel(x_ref, s_ref, o_ref):
    # x_ref: (bn, bc) tile of the flattened (N, CHW) input.
    # s_ref: (bn, 1) per-sample scale (mask / keep_prob), broadcast over lanes.
    o_ref[...] = (x_ref[...] * s_ref[...]).astype(o_ref.dtype)


def _drop_path_sample_kernel(x_ref, s_ref, o_ref):
    # Small-batch path: one sample per grid step along axis 0.
    # x_ref: (1, bR, 128) tile of the (N, R, 128) reshaped input.
    # s_ref: (N,) float32 per-sample scales resident in SMEM.
    s = s_ref[pl.program_id(0)]
    o_ref[...] = (x_ref[...] * s).astype(o_ref.dtype)


def drop_path_pallas(x, rand_per_sample, drop_prob: float, training: bool):
    """x: (N, ...).  rand_per_sample: (N,) uniforms in [0, 1)."""
    if drop_prob == 0.0 or not training:
        return x

    keep_prob = 1.0 - drop_prob
    orig_shape = x.shape
    N = int(orig_shape[0])
    CHW = 1
    for d in orig_shape[1:]:
        CHW *= int(d)

    itemsize = jnp.dtype(x.dtype).itemsize
    pack = {4: 8, 2: 16, 1: 32}.get(itemsize, 8)

    # Mask / scale math strictly in float32 (low-precision rounding near 1.0
    # could flip the mask or bias 1/keep_prob).
    r32 = rand_per_sample.astype(jnp.float32)
    scale = jnp.floor(keep_prob + r32) * jnp.float32(1.0 / keep_prob)  # (N,)

    x2 = x.reshape(N, CHW)

    compiler_params = pltpu.CompilerParams(
        dimension_semantics=("parallel", "parallel"),
        vmem_limit_bytes=_VMEM_LIMIT_BYTES,
    )
    cost = pl.CostEstimate(
        flops=N * CHW,
        transcendentals=0,
        bytes_accessed=2 * N * CHW * itemsize + N * 4,
    )

    # ------------------------------------------------------------------
    # Small-batch path: with N < pack, a (N, bc) block leaves the 8/16/32
    # sublanes mostly empty. Source sublanes from the feature axis instead.
    # ------------------------------------------------------------------
    if N < pack and CHW >= 128 and CHW % 128 == 0:
        L = 128
        R = CHW // L
        max_rows = max(1, _MAX_TILE_BYTES // (L * itemsize))
        bR = min(R, max_rows)
        if bR >= pack:
            bR = _round_down(bR, pack)
        else:
            bR = R  # full dim (satisfies the block-shape constraint)

        x3 = x2.reshape(N, R, L)
        grid = (N, pl.cdiv(R, bR))
        out = pl.pallas_call(
            _drop_path_sample_kernel,
            out_shape=jax.ShapeDtypeStruct((N, R, L), x.dtype),
            grid=grid,
            in_specs=[
                pl.BlockSpec((1, bR, L), lambda i, j: (i, j, 0)),
                # Whole (N,) f32 scale vector stays resident in SMEM.
                pl.BlockSpec(memory_space=pltpu.MemorySpace.SMEM),
            ],
            out_specs=pl.BlockSpec((1, bR, L), lambda i, j: (i, j, 0)),
            cost_estimate=cost,
            compiler_params=compiler_params,
        )(x3, scale)
        return out.reshape(orig_shape)

    # ------------------------------------------------------------------
    # General path: 2-D (N, CHW) tiling; rows = samples, lanes = features.
    # ------------------------------------------------------------------
    # Native-dtype multiply for 16-bit inputs (v6e/v7x bf16 VALU); keep f32
    # otherwise.
    scale_dtype = x.dtype if itemsize == 2 else jnp.float32
    scale_col = scale.astype(scale_dtype).reshape(N, 1)

    # Lane-axis block: prefer the full row (fully contiguous DMA, 1-D grid
    # over N) when a pack-row full-width tile fits the budget; otherwise a
    # large 128-multiple width with a masked partial trailing block (cdiv).
    if CHW <= 128:
        bc = CHW  # full dim — allowed by the block-shape constraint
    elif CHW % 128 == 0 and CHW * pack * itemsize <= _MAX_TILE_BYTES:
        bc = CHW  # full row
    else:
        bc = min(_round_down(CHW, 128),
                 max(128, _round_down(_MAX_TILE_BYTES // (pack * itemsize), 128)))

    # Row-axis block from the remaining budget.
    max_rows = max(pack, _round_down(_MAX_TILE_BYTES // (bc * itemsize), pack))
    if N >= pack:
        bn = min(max_rows, _round_down(N, pack))
    else:
        bn = N  # small-N fallback (only hit when CHW is not 128-aligned)

    # Megacore (v7x has 2 TensorCores): if everything collapsed into a single
    # block but the row axis can cheaply split, split it so both cores work.
    if pl.cdiv(N, bn) * pl.cdiv(CHW, bc) == 1 and bn >= 2 * pack:
        bn = _round_down(bn // 2, pack)

    grid = (pl.cdiv(N, bn), pl.cdiv(CHW, bc))

    out = pl.pallas_call(
        _drop_path_rows_kernel,
        out_shape=jax.ShapeDtypeStruct((N, CHW), x.dtype),
        grid=grid,
        in_specs=[
            pl.BlockSpec((bn, bc), lambda i, j: (i, j)),   # x tile
            pl.BlockSpec((bn, 1), lambda i, j: (i, 0)),    # scale: constant over j
        ],
        out_specs=pl.BlockSpec((bn, bc), lambda i, j: (i, j)),
        cost_estimate=cost,
        compiler_params=compiler_params,
    )(x2, scale_col)
    return out.reshape(orig_shape)


class DropPath:
    """JAX/Pallas counterpart of the PyTorch DropPath module."""

    def __init__(self, drop_prob=None):
        self.drop_prob = drop_prob
        self.training = True

    def __call__(self, x, key):
        dp = 0.0 if self.drop_prob is None else float(self.drop_prob)
        # Per-sample uniforms; mask math is done in f32 regardless of x.dtype.
        r = jax.random.uniform(key, (x.shape[0],), dtype=jnp.float32)
        return drop_path_pallas(x, r, dp, self.training)


if __name__ == "__main__":
    key = jax.random.PRNGKey(0)
    kx, kr, kx2, kr2 = jax.random.split(key, 4)

    drop_prob = 0.3
    keep_prob = 1.0 - drop_prob

    # --- Case 1: small batch (N < sublane pack) -> 3-D per-sample path. ---
    N, C, H, W = 2, 4, 16, 16
    x = jax.random.normal(kx, (N, C, H, W), dtype=jnp.float32)

    mod = DropPath(drop_prob=drop_prob)
    mod.training = True
    out = jax.block_until_ready(mod(x, kr))

    r = jax.random.uniform(kr, (N,), dtype=jnp.float32)
    mask = jnp.floor(keep_prob + r).reshape(N, 1, 1, 1)
    ref = x / keep_prob * mask
    assert out.shape == x.shape
    assert jnp.allclose(out, ref, atol=1e-6, rtol=1e-6), "mismatch (small-N path)"

    # --- Case 2: larger batch, CHW not 128-aligned -> general 2-D path. ---
    N2, C2, H2, W2 = 16, 3, 15, 15
    x2 = jax.random.normal(kx2, (N2, C2, H2, W2), dtype=jnp.float32)
    out2 = jax.block_until_ready(mod(x2, kr2))

    r2 = jax.random.uniform(kr2, (N2,), dtype=jnp.float32)
    mask2 = jnp.floor(keep_prob + r2).reshape(N2, 1, 1, 1)
    ref2 = x2 / keep_prob * mask2
    assert out2.shape == x2.shape
    assert jnp.allclose(out2, ref2, atol=1e-6, rtol=1e-6), "mismatch (2-D path)"

    # --- Eval / drop_prob=0 path must be identity (no kernel launch). ---
    mod.training = False
    out_eval = jax.block_until_ready(mod(x, kr))
    assert jnp.array_equal(out_eval, x), "eval path must be identity"

    print("KERNEL_OK")
</pallas_src>

<mosaic_0001>
module attributes {stable_mosaic.version = 11 : i64} {
  func.func @_drop_path_sample_kernel(%arg0: i32, %arg1: i32, %arg2: memref<1x8x128xf32, #tpu.memory_space<vmem>>, %arg3: memref<2xf32, #tpu.memory_space<smem>>, %arg4: memref<1x8x128xf32, #tpu.memory_space<vmem>>) attributes {dimension_semantics = [#tpu.dimension_semantics<parallel>, #tpu.dimension_semantics<parallel>], iteration_bounds = array<i64: 2, 1>, scalar_prefetch = 0 : i64, scratch_operands = 0 : i64, tpu.core_type = #tpu.core_type<tc>, window_params = [{transform_indices = @transform_0, window_bounds = array<i64: 1, 8, 128>}, {transform_indices = @transform_1, window_bounds = array<i64: 2>}, {transform_indices = @transform_2, window_bounds = array<i64: 1, 8, 128>}]} {
    %0 = arith.index_cast %arg0 : i32 to index
    %1 = memref.load %arg3[%0] : memref<2xf32, #tpu.memory_space<smem>>
    %c0 = arith.constant 0 : index
    %c0_0 = arith.constant 0 : index
    %c0_1 = arith.constant 0 : index
    %2 = vector.load %arg2[%c0, %c0_0, %c0_1] : memref<1x8x128xf32, #tpu.memory_space<vmem>>, vector<1x8x128xf32>
    %3 = vector.broadcast %1 : f32 to vector<1x8x128xf32>
    %4 = arith.mulf %2, %3 : vector<1x8x128xf32>
    %c0_2 = arith.constant 0 : index
    %c0_3 = arith.constant 0 : index
    %c0_4 = arith.constant 0 : index
    %5 = vector.load %arg4[%c0_2, %c0_3, %c0_4] : memref<1x8x128xf32, #tpu.memory_space<vmem>>, vector<1x8x128xf32>
    tpu.vector_store %arg4[%c0_2, %c0_3, %c0_4], %4 {strides = array<i32>} : memref<1x8x128xf32, #tpu.memory_space<vmem>>, vector<1x8x128xf32>,
    return
  }
  func.func @transform_0(%arg0: i32, %arg1: i32) -> (i32, i32, i32) {
    %c0_i32 = arith.constant 0 : i32
    %c0_i32_0 = arith.constant 0 : i32
    return %arg0, %arg1, %c0_i32 : i32, i32, i32
  }
  func.func @transform_1(%arg0: i32, %arg1: i32) -> i32 {
    %c0_i32 = arith.constant 0 : i32
    %c0_i32_0 = arith.constant 0 : i32
    return %c0_i32 : i32
  }
  func.func @transform_2(%arg0: i32, %arg1: i32) -> (i32, i32, i32) {
    %c0_i32 = arith.constant 0 : i32
    %c0_i32_0 = arith.constant 0 : i32
    return %arg0, %arg1, %c0_i32 : i32, i32, i32
  }
}

</mosaic_0001>

<llo_original>
// kernel: tpu_custom_call.1
$region0: #{tpu_custom_call.1}
  #allocation0 [shape = 'u32[]', space=smem, size = 0x4, offset = 0x4, fixed_abs, tag = 'smem constant byte address 0x4 - core index']
  #allocation1 [shape = 'u32[144,128]{1,0:T(1,128)}', space=vmem, size = 0x12000, scoped, tag = 'internal scratch']
  %s0 = inlined_call_operand.hbm [shape: f32[2,8,128], index: 0, kind: input, shape index: {}]
  %s1 = inlined_call_operand.vmem [shape: f32[2], index: 1, kind: input, shape index: {}]
  %s2 = inlined_call_operand.hbm [shape: f32[2,8,128], index: 2, kind: output, shape index: {}]
  %s3 = sld [smem:[#allocation0]]
  $region49: #{tpu_custom_call.1} parent=0
    _
  %s5 = ssub.s32 1, %s3
  %s6 = scalar_select 0, %s5, %s3
  $region1: #{tpu_custom_call.1} parent=0
    #allocation2 [shape = 'u8[8192]{0}', space=vmem, size = 0x2000, scoped, tag = 'input window, operand 0']
    #allocation3 [shape = 's32[2]{0}', space=sflag, size = 0x8, scoped, tag = 'scoped memory for tpu_custom_call.1']
    #allocation4 [shape = 's32[2]{0}', space=sflag, size = 0x8, scoped, tag = 'scoped memory for tpu_custom_call.1']
    #allocation5 [shape = 's32[2]{0}', space=sflag, size = 0x8, scoped, tag = 'scoped memory for tpu_custom_call.1']
    #allocation6 [shape = 'u8[512]{0}', space=smem, size = 0x200, scoped, tag = 'input window, operand 1, single buffered']
    #allocation7 [shape = 'u8[8192]{0}', space=vmem, size = 0x2000, scoped, tag = 'output window, operand 0']
    %7 = vsyncpa [#allocation3], 0
    %s8 = scalar_lea.sflag [#allocation3], 1
    %9 = vsyncpa %s8, 0
    %10 = vsyncpa [#allocation5], 0
    %11 = vsyncpa [#allocation4], 0
    %s12 = scalar_lea.sflag [#allocation4], 1
    %13 = vsyncpa %s12, 0
    loop: start=0, step=1, limit=4
    $region2: #{tpu_custom_call.1} parent=1 // loop_pre_header
      _
    $region3: #{tpu_custom_call.1} parent=1 // loop_header
      %s15 = sphi 0, %s19
      %p16 = scmp.ge.s32.totalorder %s15, 4
      %s22 = sphi 0, %s34
      %s23 = sphi 0, %s30
      %s24 = sphi 0, %s22
      %s25 = sphi 0, %s23
      %s26 = sphi 0, %s24
      %s27 = sphi 0, %s25
      %s39 = sphi 0, %s41
      %s42 = sphi 0, %s39
      %s43 = sphi 0, %s42
      %s59 = sphi 0, %s43
      %s63 = sphi 0, %s63
      %s65 = sphi 0, %s63
      %s66 = sphi 0, %s65
      %s80 = sphi 0, %s66
      %s88 = sphi 0, %s90
      %s91 = sphi 0, %s88
      %s92 = sphi 0, %s91
      %s108 = sphi 0, %s92
    $region4: #{tpu_custom_call.1} parent=1 // loop_header_branch
      %18 = sbr.rel (%p16) target = $region8
    $region5: #{tpu_custom_call.1} parent=1 // loop_body
      %s20 = ssub.s32 %s15, 1
      %s21 = ssub.s32 %s15, 2
      %s28 = sadd.s32 1, %s23
      %p29 = scmp.ge.s32.totalorder %s28, 1
      %s30 = scalar_select %p29, 0, %s28
      %s31 = sadd.s32 1, %s22
      %s32 = scalar_select %p29, %s31, %s22
      %p33 = scmp.ge.s32.totalorder %s32, 2
      %s34 = scalar_select %p33, 0, %s32
      %s35 = ssub.s32 %s22, %s34
      %s36 = ssub.s32 %s23, %s30
      %s37 = sor.u32 %s35, %s36
      %p38 = scmp.eq.s32.totalorder %s37, 0
      %s40 = sadd.s32 %s39, 1
      %s41 = scalar_select %p38, %s39, %s40
      %p44 = pneg %p38
      %p45 = scmp.eq.s32.totalorder %s15, 1
      %p46 = por %p44, %p45
      %p47 = scmp.ne.s32.totalorder %s39, %s42
      %p48 = scmp.eq.s32.totalorder %s15, 0
      %p49 = por %p47, %p48
      %p50 = scmp.ne.s32.totalorder %s39, %s42
      %p51 = scmp.eq.s32.totalorder %s20, 1
      %p52 = por %p50, %p51
      %p53 = scmp.ne.s32.totalorder %s42, %s43
      %p54 = scmp.eq.s32.totalorder %s20, 0
      %p55 = por %p53, %p54
      %p56 = scmp.ne.s32.totalorder %s42, %s43
      %p57 = scmp.eq.s32.totalorder %s21, 1
      %p58 = por %p56, %p57
      %p60 = scmp.ne.s32.totalorder %s43, %s59
      %p61 = scmp.eq.s32.totalorder %s21, 0
      %p62 = por %p60, %p61
      %s64 = sadd.s32 %s63, 1
      %p67 = scmp.eq.s32.totalorder %s15, 1
      %p68 = scmp.ne.s32.totalorder %s63, %s65
      %p69 = scmp.eq.s32.totalorder %s15, 0
      %p70 = por %p68, %p69
      %p71 = scmp.ne.s32.totalorder %s63, %s65
      %p72 = scmp.eq.s32.totalorder %s20, 1
      %p73 = por %p71, %p72
      %p74 = scmp.ne.s32.totalorder %s65, %s66
      %p75 = scmp.eq.s32.totalorder %s20, 0
      %p76 = por %p74, %p75
      %p77 = scmp.ne.s32.totalorder %s65, %s66
      %p78 = scmp.eq.s32.totalorder %s21, 1
      %p79 = por %p77, %p78
      %p81 = scmp.ne.s32.totalorder %s66, %s80
      %p82 = scmp.eq.s32.totalorder %s21, 0
      %p83 = por %p81, %p82
      %s84 = ssub.s32 %s22, %s34
      %s85 = ssub.s32 %s23, %s30
      %s86 = sor.u32 %s84, %s85
      %p87 = scmp.eq.s32.totalorder %s86, 0
      %s89 = sadd.s32 %s88, 1
      %s90 = scalar_select %p87, %s88, %s89
      %p93 = pneg %p87
      %p94 = scmp.eq.s32.totalorder %s15, 1
      %p95 = por %p93, %p94
      %p96 = scmp.ne.s32.totalorder %s88, %s91
      %p97 = scmp.eq.s32.totalorder %s15, 0
      %p98 = por %p96, %p97
      %p99 = scmp.ne.s32.totalorder %s88, %s91
      %p100 = scmp.eq.s32.totalorder %s20, 1
      %p101 = por %p99, %p100
      %p102 = scmp.ne.s32.totalorder %s91, %s92
      %p103 = scmp.eq.s32.totalorder %s20, 0
      %p104 = por %p102, %p103
      %p105 = scmp.ne.s32.totalorder %s91, %s92
      %p106 = scmp.eq.s32.totalorder %s21, 1
      %p107 = por %p105, %p106
      %p109 = scmp.ne.s32.totalorder %s92, %s108
      %p110 = scmp.eq.s32.totalorder %s21, 0
      %p111 = por %p109, %p110
      %p112 = scmp.le.s32.totalorder 1, %s15
      %p113 = scmp.lt.s32.totalorder %s15, 3
      %p114 = pnand %p112, %p113
      %p115 = pneg %p114
      // Predicated region
      $region9: #{tpu_custom_call.1} parent=5 // pred_check
        _
      $region10: #{tpu_custom_call.1} parent=5 // pred_check_branch
        %117 = sbr.rel (%p114) target = $region12
      $region11: #{tpu_custom_call.1} parent=5 // pred_region
        %s118 = ssub.s32 %s15, 1
        // Predicated region
        $region13: #{tpu_custom_call.1} parent=11 // pred_check
          %p119 = pneg %p76
        $region14: #{tpu_custom_call.1} parent=11 // pred_check_branch
          %121 = sbr.rel (%p119) target = $region16
        $region15: #{tpu_custom_call.1} parent=11 // pred_region
          %s123 = ssub.s32 16, 16
          %124 = vsyncadd [#allocation5], %s123
          %s126 = sshll.u32 %s1, 4
          %s127 = int_to_ptr.vmem [resolvable:$true] %s126
          %129 = dma.vmem_to_smem %s127, 16, [#allocation6], [#allocation5]
        $region16: #{tpu_custom_call.1} parent=11 // pred_fallthru
          _
      $region12: #{tpu_custom_call.1} parent=5 // pred_fallthru
        _
      %p130 = scmp.lt.s32.totalorder %s15, 2
      // Predicated region
      $region17: #{tpu_custom_call.1} parent=5 // pred_check
        %p131 = pneg %p130
      $region18: #{tpu_custom_call.1} parent=5 // pred_check_branch
        %133 = sbr.rel (%p131) target = $region20
      $region19: #{tpu_custom_call.1} parent=5 // pred_region
        // Predicated region
        $region21: #{tpu_custom_call.1} parent=19 // pred_check
          %p134 = pneg %p49
        $region22: #{tpu_custom_call.1} parent=19 // pred_check_branch
          %136 = sbr.rel (%p134) target = $region24
        $region23: #{tpu_custom_call.1} parent=19 // pred_region
          %s137 = sand.u32 %s39, 1
          %s138 = scalar_lea.sflag [#allocation3], %s137
          %s139 = sand.u32 %s39, 1
          %s140 = smul.addr %s139, 8
          %s141 = scalar_lea.vmem [#allocation2], %s140
          %s143 = ssub.s32 128, 128
          %144 = vsyncadd %s138, %s143
          %s145 = sadd.s32 %s23, %s22
          %s146 = smul.addr %s145, 128
          %s147 = scalar_lea.hbm %s0, %s146
          %s149 = sshll.u32 %s141, 4
          %s150 = int_to_ptr.vmem [resolvable:$true] %s149
          %152 = dma.hbm_to_vmem [thread:$0]  %s147, 128, %s150, %s138
        $region24: #{tpu_custom_call.1} parent=19 // pred_fallthru
          _
      $region20: #{tpu_custom_call.1} parent=5 // pred_fallthru
        _
      %p153 = scmp.le.s32.totalorder 1, %s15
      %p154 = scmp.lt.s32.totalorder %s15, 3
      %p155 = pnand %p153, %p154
      %p156 = pneg %p155
      // Predicated region
      $region25: #{tpu_custom_call.1} parent=5 // pred_check
        _
      $region26: #{tpu_custom_call.1} parent=5 // pred_check_branch
        %158 = sbr.rel (%p155) target = $region28
      $region27: #{tpu_custom_call.1} parent=5 // pred_region
        %s159 = ssub.s32 %s15, 1
        %s160 = sand.u32 %s42, 1
        %s161 = scalar_lea.sflag [#allocation3], %s160
        %s162 = sand.u32 %s42, 1
        %s163 = smul.addr %s162, 8
        %s164 = scalar_lea.vmem [#allocation2], %s163
        // Predicated region
        $region29: #{tpu_custom_call.1} parent=27 // pred_check
          %p165 = pneg %p55
        $region30: #{tpu_custom_call.1} parent=27 // pred_check_branch
          %167 = sbr.rel (%p165) target = $region32
        $region31: #{tpu_custom_call.1} parent=27 // pred_region
          %168 = dma.done %s161, 128
        $region32: #{tpu_custom_call.1} parent=27 // pred_fallthru
          _
        // Predicated region
        $region33: #{tpu_custom_call.1} parent=27 // pred_check
          %p169 = pneg %p76
        $region34: #{tpu_custom_call.1} parent=27 // pred_check_branch
          %171 = sbr.rel (%p169) target = $region36
        $region35: #{tpu_custom_call.1} parent=27 // pred_region
          %172 = dma.done [#allocation5], 16
        $region36: #{tpu_custom_call.1} parent=27 // pred_fallthru
          _
        %173 = sfence
        %s174 = sand.u32 %s42, 1
        %s175 = scalar_lea.sflag [#allocation3], %s174
        %s176 = sand.u32 %s42, 1
        %s177 = smul.addr %s176, 8
        %s178 = scalar_lea.vmem [#allocation2], %s177
        %p179 = pneg %p55
        %p180 = pneg %p52
        %p181 = pneg %p76
        %p182 = pneg %p73
        %p183 = pneg %p104
        %p184 = pneg %p101
        %s185 = sand.u32 %s91, 1
        %s186 = scalar_lea.sflag [#allocation4], %s185
        %s187 = sand.u32 %s91, 1
        %s188 = smul.addr %s187, 8
        %s189 = scalar_lea.vmem [#allocation7], %s188
        %s190 = sld [smem:[#allocation6 + %s24]]
        %v191 = vld [vmem:[%s164] sm:$0xff]
        %v192 = vstv %s190
        %v193 = vmul.f32 %v191, %v192
        %194 = vst [vmem:[%s189] sm:$0xff] %v193
        %s195 = sand.u32 %s91, 1
        %s196 = scalar_lea.sflag [#allocation4], %s195
        %s197 = sand.u32 %s91, 1
        %s198 = smul.addr %s197, 8
        %s199 = scalar_lea.vmem [#allocation7], %s198
        // Predicated region
        $region37: #{tpu_custom_call.1} parent=27 // pred_check
          %p200 = pneg %p101
        $region38: #{tpu_custom_call.1} parent=27 // pred_check_branch
          %202 = sbr.rel (%p200) target = $region40
        $region39: #{tpu_custom_call.1} parent=27 // pred_region
          %s204 = ssub.s32 128, 128
          %205 = vsyncadd %s196, %s204
          %s206 = sadd.s32 %s25, %s24
          %s207 = smul.addr %s206, 128
          %s208 = scalar_lea.hbm %s2, %s207
          %s210 = sshll.u32 %s199, 4
          %s211 = int_to_ptr.vmem [resolvable:$true] %s210
          %213 = dma.vmem_to_hbm [thread:$0]  %s211, 128, %s208, %s196
        $region40: #{tpu_custom_call.1} parent=27 // pred_fallthru
          _
      $region28: #{tpu_custom_call.1} parent=5 // pred_fallthru
        _
      %p214 = scmp.le.s32.totalorder 2, %s15
      // Predicated region
      $region41: #{tpu_custom_call.1} parent=5 // pred_check
        %p215 = pneg %p214
      $region42: #{tpu_custom_call.1} parent=5 // pred_check_branch
        %217 = sbr.rel (%p215) target = $region44
      $region43: #{tpu_custom_call.1} parent=5 // pred_region
        %s218 = ssub.s32 %s15, 2
        // Predicated region
        $region45: #{tpu_custom_call.1} parent=43 // pred_check
          %p219 = pneg %p107
        $region46: #{tpu_custom_call.1} parent=43 // pred_check_branch
          %221 = sbr.rel (%p219) target = $region48
        $region47: #{tpu_custom_call.1} parent=43 // pred_region
          %s222 = sand.u32 %s92, 1
          %s223 = scalar_lea.sflag [#allocation4], %s222
          %s224 = sand.u32 %s92, 1
          %s225 = smul.addr %s224, 8
          %s226 = scalar_lea.vmem [#allocation7], %s225
          %227 = dma.done %s223, 128
        $region48: #{tpu_custom_call.1} parent=43 // pred_fallthru
          _
      $region44: #{tpu_custom_call.1} parent=5 // pred_fallthru
        _
    $region6: #{tpu_custom_call.1} parent=1 // loop_footer
      %s19 = sadd.s32 1, %s15
    $region7: #{tpu_custom_call.1} parent=1 // loop_footer_branch
      %14 = sbr.rel target = $region3
    $region8: #{tpu_custom_call.1} parent=1 // loop_exit
      _
    %228 = vsyncpa [#allocation3], 1
    %s229 = scalar_lea.sflag [#allocation3], 1
    %230 = vsyncpa %s229, 1
    %231 = vsyncpa [#allocation4], 1
    %s232 = scalar_lea.sflag [#allocation4], 1
    %233 = vsyncpa %s232, 1
    %234 = vsyncpa [#allocation5], 1
    %s235 = scalar_lea.sflag [#allocation5], 1
    %236 = vsyncpa %s235, 1

</llo_original>
